<compile_context>
chip_gen: v7x
topology: tpu7x:2x2x1
jax: 0.10.0
libtpu: 0.0.40
codegen_flags: <defaults>
</compile_context>

<pallas_src>
import jax
import jax.numpy as jnp
from jax import lax
from jax.experimental import pallas as pl
from jax.experimental.pallas import tpu as pltpu

LANE = 128
STRIP = 256                    # rows per in-kernel strip (256*128*4B = 128 KiB f32)
MAX_BLOCK_BYTES = 2 << 20      # per-input per-grid-step VMEM block budget (2 MiB)


def _round_up(n, m):
    return ((n + m - 1) // m) * m


def _make_kernel(row_tile, strip, n_strips):
    """Build the kernel for a fixed (row_tile, strip, n_strips) configuration."""

    def kernel(dims_ref, x_ref, t_ref, v_ref, part_ref):
        full_rows = dims_ref[0]          # total // 128  (number of full valid rows)
        rem = dims_ref[1]                # total %  128  (valid lanes in last row)
        chunk_row0 = pl.program_id(0) * row_tile

        def strip_partials(r0, masked):
            x = x_ref[pl.ds(r0, strip), :].astype(jnp.float32)
            t = t_ref[pl.ds(r0, strip), :].astype(jnp.float32)
            v = v_ref[pl.ds(r0, strip), :].astype(jnp.float32)
            # sigmoid via tanh: one EUP push per element instead of exp + divide.
            sig = 0.5 + 0.5 * jnp.tanh(0.5 * x)
            if masked:
                g_row = (chunk_row0 + r0
                         + lax.broadcasted_iota(jnp.int32, (strip, LANE), 0))
                lane = lax.broadcasted_iota(jnp.int32, (strip, LANE), 1)
                keep = (g_row < full_rows) | ((g_row == full_rows) & (lane < rem))
                zero = jnp.zeros_like(sig)
                sig = jnp.where(keep, sig, zero)
                t = jnp.where(keep, t, zero)
                v = jnp.where(keep, v, zero)
            lw = t - t * v               # target * (1 - var)
            up = t + v                   # target + var

            def psum(a):
                # (strip,128) -> (8,128): tile-aligned, pure VPU adds (no XLU).
                return jnp.sum(a.reshape(-1, 8, LANE), axis=0)

            return (psum(sig * lw),      # tp_lw partial
                    psum(sig * up),      # tp_up partial
                    psum(sig),           # sum(sigmoid(x)) partial
                    psum(up))            # sum(target) + sum(var) partial

        def run(masked):
            if n_strips == 1:
                return strip_partials(0, masked)

            def body(s, acc):
                r0 = pl.multiple_of(s * strip, strip)
                p = strip_partials(r0, masked)
                return tuple(a + b for a, b in zip(acc, p))

            init = tuple(jnp.zeros((8, LANE), jnp.float32) for _ in range(4))
            return lax.fori_loop(0, n_strips, body, init)

        def write(masked):
            p0, p1, p2, p3 = run(masked)
            part_ref[0, 0] = p0
            part_ref[0, 1] = p1
            part_ref[0, 2] = p2
            part_ref[0, 3] = p3

        is_last = pl.program_id(0) == pl.num_programs(0) - 1

        @pl.when(jnp.logical_not(is_last))
        def _():
            write(False)                 # interior steps: no masking work at all

        @pl.when(is_last)
        def _():
            write(True)                  # last step: mask the ragged tail

    return kernel


def bce_dice_loss_weight(inp, target, var):
    """Pallas implementation of BCEDiceLoss_weight.forward (returns a scalar)."""
    assert inp.shape == target.shape == var.shape
    total = int(inp.size)
    rows = pl.cdiv(total, LANE)
    max_item = max(inp.dtype.itemsize, target.dtype.itemsize, var.dtype.itemsize)

    if rows < STRIP:
        # Tiny input: one full-array block (padding <= a few KiB, negligible).
        rows_padded = _round_up(max(rows, 1), 8)
        row_tile = rows_padded
        strip = rows_padded
        n_strips = 1
    else:
        rows_padded = rows               # ragged last block handled by in-kernel mask
        cap_rows = max(STRIP,
                       (MAX_BLOCK_BYTES // (LANE * max_item)) // STRIP * STRIP)
        # Cap at ~half the rows so >=2 grid chunks exist (both v7x TensorCores).
        row_tile = min(cap_rows, _round_up(pl.cdiv(rows, 2), STRIP))
        strip = STRIP
        n_strips = row_tile // STRIP

    num_chunks = pl.cdiv(rows_padded, row_tile)
    padded_total = rows_padded * LANE

    def prep(a):
        flat = a.reshape(-1)             # free row-major bitcast; NO dtype cast
        if padded_total != total:
            # TODO(synk): only hit when inp.size % 128 != 0 or for tiny inputs;
            # this pad materialises one HBM copy.  Values are irrelevant — the
            # tail is masked in-kernel via the element count, not sentinels.
            flat = jnp.pad(flat, (0, padded_total - total))
        return flat.reshape(rows_padded, LANE)

    x2, t2, v2 = prep(inp), prep(target), prep(var)
    dims = jnp.array([total // LANE, total % LANE], dtype=jnp.int32)

    tile_spec = pl.BlockSpec((row_tile, LANE), lambda i, _dims: (i, 0))

    partials = pl.pallas_call(
        _make_kernel(row_tile, strip, n_strips),
        out_shape=jax.ShapeDtypeStruct((num_chunks, 4, 8, LANE), jnp.float32),
        grid_spec=pltpu.PrefetchScalarGridSpec(
            num_scalar_prefetch=1,
            grid=(num_chunks,),
            in_specs=[tile_spec, tile_spec, tile_spec],
            out_specs=pl.BlockSpec((1, 4, 8, LANE),
                                   lambda i, _dims: (i, 0, 0, 0)),
        ),
        compiler_params=pltpu.CompilerParams(
            dimension_semantics=("parallel",),
            vmem_limit_bytes=32 * 1024 * 1024),
    )(dims, x2, t2, v2)

    # Tiny epilogue reduce + combine (outside the kernel so the grid axis can
    # stay "parallel" and use both TensorCores on v7x).
    sums = jnp.sum(partials, axis=(0, 2, 3))            # (4,)
    tp_lw, tp_up, sum_x, sum_up = sums[0], sums[1], sums[2], sums[3]
    smooth = 1e-05
    # fp_lw = sum_x  - tp_lw  =>  tp_lw + fp_lw = sum(sigmoid(x))
    # fn_up = sum_up - tp_up  =>  tp_up + fn_up = sum(target) + sum(var)
    return (1.0 - tp_lw / (smooth + sum_x)) + (1.0 - tp_up / (smooth + sum_up))


def _reference(inp, target, var):
    x = jax.nn.sigmoid(inp.astype(jnp.float32)).reshape(-1)
    t = target.astype(jnp.float32).reshape(-1)
    v = var.astype(jnp.float32).reshape(-1)
    lw = t - t * v
    up = t + v
    tp_lw = jnp.sum(x * lw)
    fp_lw = jnp.sum((1.0 - lw) * x)
    tp_up = jnp.sum(x * up)
    fn_up = jnp.sum(up * (1.0 - x))
    smooth = 1e-05
    return (1.0 - tp_lw / (smooth + tp_lw + fp_lw)
            + (1.0 - tp_up / (smooth + tp_up + fn_up)))


if __name__ == "__main__":
    key = jax.random.PRNGKey(0)
    k1, k2, k3 = jax.random.split(key, 3)

    # NCHW, matching the PyTorch convention.
    B, C, H, W = 2, 4, 16, 16
    x = jax.random.normal(k1, (B, C, H, W), dtype=jnp.float32)
    t = (jax.random.uniform(k2, (B, C, H, W)) > 0.5).astype(jnp.float32)
    v = jax.random.uniform(k3, (B, C, H, W), dtype=jnp.float32)
    loss = jax.block_until_ready(bce_dice_loss_weight(x, t, v))
    ref = jax.block_until_ready(_reference(x, t, v))
    assert jnp.allclose(loss, ref, rtol=1e-4, atol=1e-5), (loss, ref)

    # Multi-chunk case: 73728 elems -> 576 rows -> 2 chunks of 512 rows,
    # 2 strips per chunk (exercises the fori_loop) and a partial last block
    # (exercises last-step masking with garbage rows).
    shape2 = (4, 8, 64, 36)
    x2 = jax.random.normal(k1, shape2, dtype=jnp.float32)
    t2 = (jax.random.uniform(k2, shape2) > 0.5).astype(jnp.float32)
    v2 = jax.random.uniform(k3, shape2, dtype=jnp.float32)
    l2 = jax.block_until_ready(bce_dice_loss_weight(x2, t2, v2))
    r2 = jax.block_until_ready(_reference(x2, t2, v2))
    assert jnp.allclose(l2, r2, rtol=1e-4, atol=1e-5), (l2, r2)

    # bf16 passthrough: native-dtype streaming, cast to f32 inside the kernel.
    xb, tb, vb = (a.astype(jnp.bfloat16) for a in (x2, t2, v2))
    lb = jax.block_until_ready(bce_dice_loss_weight(xb, tb, vb))
    rb = jax.block_until_ready(_reference(xb, tb, vb))
    assert jnp.allclose(lb, rb, rtol=1e-3, atol=1e-3), (lb, rb)

    # Ragged shape (size not a multiple of 128): tail masked in-kernel.
    shape3 = (2, 3, 7, 5)
    xr = jax.random.normal(k1, shape3, dtype=jnp.float32)
    tr = (jax.random.uniform(k2, shape3) > 0.5).astype(jnp.float32)
    vr = jax.random.uniform(k3, shape3, dtype=jnp.float32)
    lr = jax.block_until_ready(bce_dice_loss_weight(xr, tr, vr))
    rr = jax.block_until_ready(_reference(xr, tr, vr))
    assert jnp.allclose(lr, rr, rtol=1e-4, atol=1e-5), (lr, rr)

    print("KERNEL_OK")
</pallas_src>

<mosaic_0001>
module attributes {stable_mosaic.version = 11 : i64} {
  func.func @kernel(%arg0: i32, %arg1: memref<2xi32, #tpu.memory_space<smem>>, %arg2: memref<16x128xf32, #tpu.memory_space<vmem>>, %arg3: memref<16x128xf32, #tpu.memory_space<vmem>>, %arg4: memref<16x128xf32, #tpu.memory_space<vmem>>, %arg5: memref<1x4x8x128xf32, #tpu.memory_space<vmem>>) attributes {dimension_semantics = [#tpu.dimension_semantics<parallel>], iteration_bounds = array<i64: 1>, scalar_prefetch = 1 : i64, scratch_operands = 0 : i64, tpu.core_type = #tpu.core_type<tc>, window_params = [{transform_indices = @transform_0, window_bounds = array<i64: 16, 128>}, {transform_indices = @transform_1, window_bounds = array<i64: 16, 128>}, {transform_indices = @transform_2, window_bounds = array<i64: 16, 128>}, {transform_indices = @transform_3, window_bounds = array<i64: 1, 4, 8, 128>}]} {
    %c0 = arith.constant 0 : index
    %0 = memref.load %arg1[%c0] : memref<2xi32, #tpu.memory_space<smem>>
    %c1 = arith.constant 1 : index
    %1 = memref.load %arg1[%c1] : memref<2xi32, #tpu.memory_space<smem>>
    %c16_i32 = arith.constant 16 : i32
    %2 = arith.muli %arg0, %c16_i32 : i32
    %c0_i32 = arith.constant 0 : i32
    %3 = arith.cmpi eq, %arg0, %c0_i32 : i32
    %true = arith.constant true
    %4 = arith.xori %3, %true : i1
    %5 = arith.extui %4 : i1 to i32
    %c0_i32_0 = arith.constant 0 : i32
    %6 = arith.cmpi ne, %5, %c0_i32_0 : i32
    scf.if %6 {
      %c0_2 = arith.constant 0 : index
      %c0_3 = arith.constant 0 : index
      %9 = vector.load %arg2[%c0_2, %c0_3] : memref<16x128xf32, #tpu.memory_space<vmem>>, vector<16x128xf32>
      %c0_4 = arith.constant 0 : index
      %c0_5 = arith.constant 0 : index
      %10 = vector.load %arg3[%c0_4, %c0_5] : memref<16x128xf32, #tpu.memory_space<vmem>>, vector<16x128xf32>
      %c0_6 = arith.constant 0 : index
      %c0_7 = arith.constant 0 : index
      %11 = vector.load %arg4[%c0_6, %c0_7] : memref<16x128xf32, #tpu.memory_space<vmem>>, vector<16x128xf32>
      %cst = arith.constant 5.000000e-01 : f32
      %12 = vector.broadcast %cst : f32 to vector<16x128xf32>
      %13 = arith.mulf %12, %9 : vector<16x128xf32>
      %14 = math.tanh %13 : vector<16x128xf32>
      %cst_8 = arith.constant 5.000000e-01 : f32
      %15 = vector.broadcast %cst_8 : f32 to vector<16x128xf32>
      %16 = arith.mulf %15, %14 : vector<16x128xf32>
      %cst_9 = arith.constant 5.000000e-01 : f32
      %17 = vector.broadcast %cst_9 : f32 to vector<16x128xf32>
      %18 = arith.addf %17, %16 : vector<16x128xf32>
      %19 = arith.mulf %10, %11 : vector<16x128xf32>
      %20 = arith.subf %10, %19 : vector<16x128xf32>
      %21 = arith.addf %10, %11 : vector<16x128xf32>
      %22 = arith.mulf %18, %20 : vector<16x128xf32>
      %23 = vector.shape_cast %22 : vector<16x128xf32> to vector<2x8x128xf32>
      %cst_10 = arith.constant dense<0.000000e+00> : vector<8x128xf32>
      %24 = vector.multi_reduction <add>, %23, %cst_10 [0] : vector<2x8x128xf32> to vector<8x128xf32>
      %25 = arith.mulf %18, %21 : vector<16x128xf32>
      %26 = vector.shape_cast %25 : vector<16x128xf32> to vector<2x8x128xf32>
      %cst_11 = arith.constant dense<0.000000e+00> : vector<8x128xf32>
      %27 = vector.multi_reduction <add>, %26, %cst_11 [0] : vector<2x8x128xf32> to vector<8x128xf32>
      %28 = vector.shape_cast %18 : vector<16x128xf32> to vector<2x8x128xf32>
      %cst_12 = arith.constant dense<0.000000e+00> : vector<8x128xf32>
      %29 = vector.multi_reduction <add>, %28, %cst_12 [0] : vector<2x8x128xf32> to vector<8x128xf32>
      %30 = vector.shape_cast %21 : vector<16x128xf32> to vector<2x8x128xf32>
      %cst_13 = arith.constant dense<0.000000e+00> : vector<8x128xf32>
      %31 = vector.multi_reduction <add>, %30, %cst_13 [0] : vector<2x8x128xf32> to vector<8x128xf32>
      %c0_14 = arith.constant 0 : index
      %c0_15 = arith.constant 0 : index
      %c0_16 = arith.constant 0 : index
      %c0_17 = arith.constant 0 : index
      %32 = vector.load %arg5[%c0_14, %c0_15, %c0_16, %c0_17] : memref<1x4x8x128xf32, #tpu.memory_space<vmem>>, vector<1x1x8x128xf32>
      %33 = vector.shape_cast %32 : vector<1x1x8x128xf32> to vector<8x128xf32>
      %34 = vector.shape_cast %24 : vector<8x128xf32> to vector<1x1x8x128xf32>
      tpu.vector_store %arg5[%c0_14, %c0_15, %c0_16, %c0_17], %34 {strides = array<i32>} : memref<1x4x8x128xf32, #tpu.memory_space<vmem>>, vector<1x1x8x128xf32>,
      %c0_18 = arith.constant 0 : index
      %c1_19 = arith.constant 1 : index
      %c0_20 = arith.constant 0 : index
      %c0_21 = arith.constant 0 : index
      %35 = vector.load %arg5[%c0_18, %c1_19, %c0_20, %c0_21] : memref<1x4x8x128xf32, #tpu.memory_space<vmem>>, vector<1x1x8x128xf32>
      %36 = vector.shape_cast %35 : vector<1x1x8x128xf32> to vector<8x128xf32>
      %37 = vector.shape_cast %27 : vector<8x128xf32> to vector<1x1x8x128xf32>
      tpu.vector_store %arg5[%c0_18, %c1_19, %c0_20, %c0_21], %37 {strides = array<i32>} : memref<1x4x8x128xf32, #tpu.memory_space<vmem>>, vector<1x1x8x128xf32>,
      %c0_22 = arith.constant 0 : index
      %c2 = arith.constant 2 : index
      %c0_23 = arith.constant 0 : index
      %c0_24 = arith.constant 0 : index
      %38 = vector.load %arg5[%c0_22, %c2, %c0_23, %c0_24] : memref<1x4x8x128xf32, #tpu.memory_space<vmem>>, vector<1x1x8x128xf32>
      %39 = vector.shape_cast %38 : vector<1x1x8x128xf32> to vector<8x128xf32>
      %40 = vector.shape_cast %29 : vector<8x128xf32> to vector<1x1x8x128xf32>
      tpu.vector_store %arg5[%c0_22, %c2, %c0_23, %c0_24], %40 {strides = array<i32>} : memref<1x4x8x128xf32, #tpu.memory_space<vmem>>, vector<1x1x8x128xf32>,
      %c0_25 = arith.constant 0 : index
      %c3 = arith.constant 3 : index
      %c0_26 = arith.constant 0 : index
      %c0_27 = arith.constant 0 : index
      %41 = vector.load %arg5[%c0_25, %c3, %c0_26, %c0_27] : memref<1x4x8x128xf32, #tpu.memory_space<vmem>>, vector<1x1x8x128xf32>
      %42 = vector.shape_cast %41 : vector<1x1x8x128xf32> to vector<8x128xf32>
      %43 = vector.shape_cast %31 : vector<8x128xf32> to vector<1x1x8x128xf32>
      tpu.vector_store %arg5[%c0_25, %c3, %c0_26, %c0_27], %43 {strides = array<i32>} : memref<1x4x8x128xf32, #tpu.memory_space<vmem>>, vector<1x1x8x128xf32>,
    } else {
    }
    %7 = arith.extui %3 : i1 to i32
    %c0_i32_1 = arith.constant 0 : i32
    %8 = arith.cmpi ne, %7, %c0_i32_1 : i32
    scf.if %8 {
      %c0_2 = arith.constant 0 : index
      %c0_3 = arith.constant 0 : index
      %9 = vector.load %arg2[%c0_2, %c0_3] : memref<16x128xf32, #tpu.memory_space<vmem>>, vector<16x128xf32>
      %c0_4 = arith.constant 0 : index
      %c0_5 = arith.constant 0 : index
      %10 = vector.load %arg3[%c0_4, %c0_5] : memref<16x128xf32, #tpu.memory_space<vmem>>, vector<16x128xf32>
      %c0_6 = arith.constant 0 : index
      %c0_7 = arith.constant 0 : index
      %11 = vector.load %arg4[%c0_6, %c0_7] : memref<16x128xf32, #tpu.memory_space<vmem>>, vector<16x128xf32>
      %cst = arith.constant 5.000000e-01 : f32
      %12 = vector.broadcast %cst : f32 to vector<16x128xf32>
      %13 = arith.mulf %12, %9 : vector<16x128xf32>
      %14 = math.tanh %13 : vector<16x128xf32>
      %cst_8 = arith.constant 5.000000e-01 : f32
      %15 = vector.broadcast %cst_8 : f32 to vector<16x128xf32>
      %16 = arith.mulf %15, %14 : vector<16x128xf32>
      %cst_9 = arith.constant 5.000000e-01 : f32
      %17 = vector.broadcast %cst_9 : f32 to vector<16x128xf32>
      %18 = arith.addf %17, %16 : vector<16x128xf32>
      %c0_i32_10 = arith.constant 0 : i32
      %19 = arith.addi %2, %c0_i32_10 : i32
      %20 = tpu.iota {dimensions = array<i32: 0>} : vector<16x128xi32>
      %21 = vector.broadcast %19 : i32 to vector<16x128xi32>
      %22 = arith.addi %21, %20 : vector<16x128xi32>
      %23 = tpu.iota {dimensions = array<i32: 1>} : vector<16x128xi32>
      %24 = vector.broadcast %0 : i32 to vector<16x128xi32>
      %25 = arith.cmpi slt, %22, %24 : vector<16x128xi32>
      %26 = vector.broadcast %0 : i32 to vector<16x128xi32>
      %27 = arith.cmpi eq, %22, %26 : vector<16x128xi32>
      %28 = vector.broadcast %1 : i32 to vector<16x128xi32>
      %29 = arith.cmpi slt, %23, %28 : vector<16x128xi32>
      %30 = arith.andi %27, %29 : vector<16x128xi1>
      %31 = arith.ori %25, %30 : vector<16x128xi1>
      %cst_11 = arith.constant 0.000000e+00 : f32
      %32 = vector.broadcast %cst_11 : f32 to vector<16x128xf32>
      %33 = arith.select %31, %18, %32 : vector<16x128xi1>, vector<16x128xf32>
      %34 = arith.select %31, %10, %32 : vector<16x128xi1>, vector<16x128xf32>
      %35 = arith.select %31, %11, %32 : vector<16x128xi1>, vector<16x128xf32>
      %36 = arith.mulf %34, %35 : vector<16x128xf32>
      %37 = arith.subf %34, %36 : vector<16x128xf32>
      %38 = arith.addf %34, %35 : vector<16x128xf32>
      %39 = arith.mulf %33, %37 : vector<16x128xf32>
      %40 = vector.shape_cast %39 : vector<16x128xf32> to vector<2x8x128xf32>
      %cst_12 = arith.constant dense<0.000000e+00> : vector<8x128xf32>
      %41 = vector.multi_reduction <add>, %40, %cst_12 [0] : vector<2x8x128xf32> to vector<8x128xf32>
      %42 = arith.mulf %33, %38 : vector<16x128xf32>
      %43 = vector.shape_cast %42 : vector<16x128xf32> to vector<2x8x128xf32>
      %cst_13 = arith.constant dense<0.000000e+00> : vector<8x128xf32>
      %44 = vector.multi_reduction <add>, %43, %cst_13 [0] : vector<2x8x128xf32> to vector<8x128xf32>
      %45 = vector.shape_cast %33 : vector<16x128xf32> to vector<2x8x128xf32>
      %cst_14 = arith.constant dense<0.000000e+00> : vector<8x128xf32>
      %46 = vector.multi_reduction <add>, %45, %cst_14 [0] : vector<2x8x128xf32> to vector<8x128xf32>
      %47 = vector.shape_cast %38 : vector<16x128xf32> to vector<2x8x128xf32>
      %cst_15 = arith.constant dense<0.000000e+00> : vector<8x128xf32>
      %48 = vector.multi_reduction <add>, %47, %cst_15 [0] : vector<2x8x128xf32> to vector<8x128xf32>
      %c0_16 = arith.constant 0 : index
      %c0_17 = arith.constant 0 : index
      %c0_18 = arith.constant 0 : index
      %c0_19 = arith.constant 0 : index
      %49 = vector.load %arg5[%c0_16, %c0_17, %c0_18, %c0_19] : memref<1x4x8x128xf32, #tpu.memory_space<vmem>>, vector<1x1x8x128xf32>
      %50 = vector.shape_cast %49 : vector<1x1x8x128xf32> to vector<8x128xf32>
      %51 = vector.shape_cast %41 : vector<8x128xf32> to vector<1x1x8x128xf32>
      tpu.vector_store %arg5[%c0_16, %c0_17, %c0_18, %c0_19], %51 {strides = array<i32>} : memref<1x4x8x128xf32, #tpu.memory_space<vmem>>, vector<1x1x8x128xf32>,
      %c0_20 = arith.constant 0 : index
      %c1_21 = arith.constant 1 : index
      %c0_22 = arith.constant 0 : index
      %c0_23 = arith.constant 0 : index
      %52 = vector.load %arg5[%c0_20, %c1_21, %c0_22, %c0_23] : memref<1x4x8x128xf32, #tpu.memory_space<vmem>>, vector<1x1x8x128xf32>
      %53 = vector.shape_cast %52 : vector<1x1x8x128xf32> to vector<8x128xf32>
      %54 = vector.shape_cast %44 : vector<8x128xf32> to vector<1x1x8x128xf32>
      tpu.vector_store %arg5[%c0_20, %c1_21, %c0_22, %c0_23], %54 {strides = array<i32>} : memref<1x4x8x128xf32, #tpu.memory_space<vmem>>, vector<1x1x8x128xf32>,
      %c0_24 = arith.constant 0 : index
      %c2 = arith.constant 2 : index
      %c0_25 = arith.constant 0 : index
      %c0_26 = arith.constant 0 : index
      %55 = vector.load %arg5[%c0_24, %c2, %c0_25, %c0_26] : memref<1x4x8x128xf32, #tpu.memory_space<vmem>>, vector<1x1x8x128xf32>
      %56 = vector.shape_cast %55 : vector<1x1x8x128xf32> to vector<8x128xf32>
      %57 = vector.shape_cast %46 : vector<8x128xf32> to vector<1x1x8x128xf32>
      tpu.vector_store %arg5[%c0_24, %c2, %c0_25, %c0_26], %57 {strides = array<i32>} : memref<1x4x8x128xf32, #tpu.memory_space<vmem>>, vector<1x1x8x128xf32>,
      %c0_27 = arith.constant 0 : index
      %c3 = arith.constant 3 : index
      %c0_28 = arith.constant 0 : index
      %c0_29 = arith.constant 0 : index
      %58 = vector.load %arg5[%c0_27, %c3, %c0_28, %c0_29] : memref<1x4x8x128xf32, #tpu.memory_space<vmem>>, vector<1x1x8x128xf32>
      %59 = vector.shape_cast %58 : vector<1x1x8x128xf32> to vector<8x128xf32>
      %60 = vector.shape_cast %48 : vector<8x128xf32> to vector<1x1x8x128xf32>
      tpu.vector_store %arg5[%c0_27, %c3, %c0_28, %c0_29], %60 {strides = array<i32>} : memref<1x4x8x128xf32, #tpu.memory_space<vmem>>, vector<1x1x8x128xf32>,
    } else {
    }
    return
  }
  func.func @transform_0(%arg0: i32, %arg1: memref<2xi32, #tpu.memory_space<smem>>) -> (i32, i32) {
    %c0_i32 = arith.constant 0 : i32
    %c0_i32_0 = arith.constant 0 : i32
    return %arg0, %c0_i32 : i32, i32
  }
  func.func @transform_1(%arg0: i32, %arg1: memref<2xi32, #tpu.memory_space<smem>>) -> (i32, i32) {
    %c0_i32 = arith.constant 0 : i32
    %c0_i32_0 = arith.constant 0 : i32
    return %arg0, %c0_i32 : i32, i32
  }
  func.func @transform_2(%arg0: i32, %arg1: memref<2xi32, #tpu.memory_space<smem>>) -> (i32, i32) {
    %c0_i32 = arith.constant 0 : i32
    %c0_i32_0 = arith.constant 0 : i32
    return %arg0, %c0_i32 : i32, i32
  }
  func.func @transform_3(%arg0: i32, %arg1: memref<2xi32, #tpu.memory_space<smem>>) -> (i32, i32, i32, i32) {
    %c0_i32 = arith.constant 0 : i32
    %c0_i32_0 = arith.constant 0 : i32
    %c0_i32_1 = arith.constant 0 : i32
    %c0_i32_2 = arith.constant 0 : i32
    return %arg0, %c0_i32, %c0_i32_0, %c0_i32_1 : i32, i32, i32, i32
  }
}

</mosaic_0001>

<llo_original>
// kernel: tpu_custom_call.1
$region0: #{tpu_custom_call.1}
  #allocation0 [shape = 'u32[]', space=smem, size = 0x4, offset = 0x4, fixed_abs, tag = 'smem constant byte address 0x4 - core index']
  #allocation1 [shape = 'u32[144,128]{1,0:T(1,128)}', space=vmem, size = 0x12000, scoped, tag = 'internal scratch']
  #allocation2 [shape = 's32[1]{0}', space=sflag, size = 0x4, scoped, tag = 'scoped memory for tpu_custom_call.1']
  #allocation3 [shape = 'u8[512]{0}', space=smem, size = 0x200, scoped, tag = 'prefetched SMEM operand 0']
  %s0 = inlined_call_operand.hbm [shape: s32[2], index: 0, kind: input, shape index: {}]
  %s1 = inlined_call_operand.hbm [shape: f32[16,128], index: 1, kind: input, shape index: {}]
  %s2 = inlined_call_operand.hbm [shape: f32[16,128], index: 2, kind: input, shape index: {}]
  %s3 = inlined_call_operand.hbm [shape: f32[16,128], index: 3, kind: input, shape index: {}]
  %s4 = inlined_call_operand.hbm [shape: f32[1,4,8,128], index: 4, kind: output, shape index: {}]
  %s5 = sld [smem:[#allocation0]]
  $region42: #{tpu_custom_call.1} parent=0
    _
  %s7 = ssub.s32 1, %s5
  %s8 = scalar_select 0, %s7, %s5
  %10 = dma.hbm_to_smem %s0, 16, [#allocation3], [#allocation2]
  %11 = dma.done [#allocation2], 16
  %12 = sfence
  $region1: #{tpu_custom_call.1} parent=0
    #allocation4 [shape = 'u8[8192]{0}', space=vmem, size = 0x2000, scoped, tag = 'input window, operand 1, single buffered']
    #allocation5 [shape = 's32[1]{0}', space=sflag, size = 0x4, scoped, tag = 'scoped memory for tpu_custom_call.1']
    #allocation6 [shape = 's32[1]{0}', space=sflag, size = 0x4, scoped, tag = 'scoped memory for tpu_custom_call.1']
    #allocation7 [shape = 'u8[8192]{0}', space=vmem, size = 0x2000, scoped, tag = 'input window, operand 2, single buffered']
    #allocation8 [shape = 's32[1]{0}', space=sflag, size = 0x4, scoped, tag = 'scoped memory for tpu_custom_call.1']
    #allocation9 [shape = 'u8[8192]{0}', space=vmem, size = 0x2000, scoped, tag = 'input window, operand 3, single buffered']
    #allocation10 [shape = 'u8[16384]{0}', space=vmem, size = 0x4000, scoped, tag = 'output window, operand 0, single buffered']
    %13 = vsyncpa [#allocation5], 0
    %14 = vsyncpa [#allocation8], 0
    %15 = vsyncpa [#allocation6], 0
    // Predicated region
    $region2: #{tpu_custom_call.1} parent=1 // pred_check
      _
    $region3: #{tpu_custom_call.1} parent=1 // pred_check_branch
      %17 = sbr.rel (0) target = $region5
    $region4: #{tpu_custom_call.1} parent=1 // pred_region
      %s19 = ssub.s32 256, 256
      %20 = vsyncadd [#allocation5], %s19
      %s21 = sshll.u32 [#allocation4], 4
      %s22 = int_to_ptr.vmem [resolvable:$true] %s21
      %27 = dma.hbm_to_vmem [thread:$0]  %s1, 256, %s22, [#allocation5], 128, 128, 8
    $region5: #{tpu_custom_call.1} parent=1 // pred_fallthru
      _
    // Predicated region
    $region6: #{tpu_custom_call.1} parent=1 // pred_check
      _
    $region7: #{tpu_custom_call.1} parent=1 // pred_check_branch
      %29 = sbr.rel (0) target = $region9
    $region8: #{tpu_custom_call.1} parent=1 // pred_region
      %s31 = ssub.s32 256, 256
      %32 = vsyncadd [#allocation8], %s31
      %s33 = sshll.u32 [#allocation7], 4
      %s34 = int_to_ptr.vmem [resolvable:$true] %s33
      %39 = dma.hbm_to_vmem [thread:$0]  %s2, 256, %s34, [#allocation8], 128, 128, 8
    $region9: #{tpu_custom_call.1} parent=1 // pred_fallthru
      _
    // Predicated region
    $region10: #{tpu_custom_call.1} parent=1 // pred_check
      _
    $region11: #{tpu_custom_call.1} parent=1 // pred_check_branch
      %41 = sbr.rel (0) target = $region13
    $region12: #{tpu_custom_call.1} parent=1 // pred_region
      %s43 = ssub.s32 256, 256
      %44 = vsyncadd [#allocation8], %s43
      %s45 = sshll.u32 [#allocation9], 4
      %s46 = int_to_ptr.vmem [resolvable:$true] %s45
      %51 = dma.hbm_to_vmem [thread:$0]  %s3, 256, %s46, [#allocation8], 128, 128, 8
    $region13: #{tpu_custom_call.1} parent=1 // pred_fallthru
      _
    // Predicated region
    $region14: #{tpu_custom_call.1} parent=1 // pred_check
      _
    $region15: #{tpu_custom_call.1} parent=1 // pred_check_branch
      %53 = sbr.rel (0) target = $region17
    $region16: #{tpu_custom_call.1} parent=1 // pred_region
      %54 = dma.done [#allocation5], 256
    $region17: #{tpu_custom_call.1} parent=1 // pred_fallthru
      _
    // Predicated region
    $region18: #{tpu_custom_call.1} parent=1 // pred_check
      _
    $region19: #{tpu_custom_call.1} parent=1 // pred_check_branch
      %56 = sbr.rel (0) target = $region21
    $region20: #{tpu_custom_call.1} parent=1 // pred_region
      %57 = dma.done [#allocation8], 256
    $region21: #{tpu_custom_call.1} parent=1 // pred_fallthru
      _
    // Predicated region
    $region22: #{tpu_custom_call.1} parent=1 // pred_check
      _
    $region23: #{tpu_custom_call.1} parent=1 // pred_check_branch
      %59 = sbr.rel (0) target = $region25
    $region24: #{tpu_custom_call.1} parent=1 // pred_region
      %60 = dma.done [#allocation8], 256
    $region25: #{tpu_custom_call.1} parent=1 // pred_fallthru
      _
    %s61 = sld [smem:[#allocation3]]
    %s62 = sld [smem:[#allocation3 + $0x1]]
    %s63 = smul.u32 0, 16
    %p64 = scmp.eq.s32.totalorder 0, 0
    %p65 = scmp.ne.s32.totalorder 0, 0
    // Predicated region
    $region26: #{tpu_custom_call.1} parent=1 // pred_check
      %p66 = pneg %p65
    $region27: #{tpu_custom_call.1} parent=1 // pred_check_branch
      %68 = sbr.rel (%p66) target = $region29
    $region28: #{tpu_custom_call.1} parent=1 // pred_region
      %v69 = vld [vmem:[#allocation4] sm:$0xff]
      %v70 = vld [vmem:[#allocation4 + $0x8] sm:$0xff]
      %v71 = vld [vmem:[#allocation7] sm:$0xff]
      %v72 = vld [vmem:[#allocation7 + $0x8] sm:$0xff]
      %v73 = vld [vmem:[#allocation9] sm:$0xff]
      %v74 = vld [vmem:[#allocation9 + $0x8] sm:$0xff]
      %v75 = vmul.f32 %v69, 0.5
      %v76 = vmul.f32 %v70, 0.5
      %v77 = vtanh.pop %v75
      %v78 = vtanh.pop %v76
      %v79 = vmul.f32 %v77, 0.5
      %v80 = vmul.f32 %v78, 0.5
      %v81 = vadd.f32 %v79, 0.5
      %v82 = vadd.f32 %v80, 0.5
      %v83 = vmul.f32 %v71, %v73
      %v84 = vmul.f32 %v72, %v74
      %v85 = vsub.f32 %v71, %v83
      %v86 = vsub.f32 %v72, %v84
      %v87 = vadd.f32 %v71, %v73
      %v88 = vadd.f32 %v72, %v74
      %v89 = vmul.f32 %v81, %v85
      %v90 = vmul.f32 %v82, %v86
      %v91 = vadd.f32 %v89, %v90
      %v92 = vmul.f32 %v81, %v87
      %v93 = vmul.f32 %v82, %v88
      %v94 = vadd.f32 %v92, %v93
      %v95 = vadd.f32 %v81, %v82
      %v96 = vadd.f32 %v87, %v88
      %97 = vst [vmem:[#allocation10] sm:$0xff] %v91
      %s98 = scalar_lea.vmem [#allocation10], 8
      %99 = vst [vmem:[%s98] sm:$0xff] %v94
      %s100 = scalar_lea.vmem [#allocation10], 16
      %101 = vst [vmem:[%s100] sm:$0xff] %v95
      %s102 = scalar_lea.vmem [#allocation10], 24
      %103 = vst [vmem:[%s102] sm:$0xff] %v96
    $region29: #{tpu_custom_call.1} parent=1 // pred_fallthru
      _
    // Predicated region
    $region30: #{tpu_custom_call.1} parent=1 // pred_check
      %p104 = pneg %p64
    $region31: #{tpu_custom_call.1} parent=1 // pred_check_branch
      %106 = sbr.rel (%p104) target = $region33
    $region32: #{tpu_custom_call.1} parent=1 // pred_region
      %v107 = vld [vmem:[#allocation4] sm:$0xff]
      %v108 = vld [vmem:[#allocation4 + $0x8] sm:$0xff]
      %v109 = vld [vmem:[#allocation7] sm:$0xff]
      %v110 = vld [vmem:[#allocation7 + $0x8] sm:$0xff]
      %v111 = vld [vmem:[#allocation9] sm:$0xff]
      %v112 = vld [vmem:[#allocation9 + $0x8] sm:$0xff]
      %v113 = vmul.f32 %v107, 0.5
      %v114 = vmul.f32 %v108, 0.5
      %v115 = vtanh.pop %v113
      %v116 = vtanh.pop %v114
      %v117 = vmul.f32 %v115, 0.5
      %v118 = vmul.f32 %v116, 0.5
      %v119 = vadd.f32 %v117, 0.5
      %v120 = vadd.f32 %v118, 0.5
      %v121 = vlaneseq
      %v122 = vshrl.u32 %v121, 7
      %v123 = vadd.s32 %v122, 8
      %v124 = vstv %s63
      %v125 = vadd.s32 %v124, %v122
      %v126 = vadd.s32 %v124, %v123
      %v127 = vlaneseq
      %v128 = vand.u32 %v127, 127
      %v129 = vstv %s61
      %vm130 = vcmp.lt.s32.totalorder %v125, %v129
      %vm131 = vcmp.lt.s32.totalorder %v126, %v129
      %vm132 = vcmp.eq.s32.totalorder %v125, %v129
      %vm133 = vcmp.eq.s32.totalorder %v126, %v129
      %v134 = vstv %s62
      %vm135 = vcmp.lt.s32.totalorder %v128, %v134
      %vm136 = vmand %vm132, %vm135
      %vm137 = vmand %vm133, %vm135
      %vm138 = vmor %vm130, %vm136
      %vm139 = vmor %vm131, %vm137
      %v140 = vsel %vm138, %v119, 0.0
      %v141 = vsel %vm139, %v120, 0.0
      %v142 = vsel %vm138, %v109, 0.0
      %v143 = vsel %vm139, %v110, 0.0
      %v144 = vsel %vm138, %v111, 0.0
      %v145 = vsel %vm139, %v112, 0.0
      %v146 = vmul.f32 %v142, %v144
      %v147 = vmul.f32 %v143, %v145
      %v148 = vsub.f32 %v142, %v146
      %v149 = vsub.f32 %v143, %v147
      %v150 = vadd.f32 %v142, %v144
      %v151 = vadd.f32 %v143, %v145
      %v152 = vmul.f32 %v140, %v148
      %v153 = vmul.f32 %v141, %v149
      %v154 = vadd.f32 %v152, %v153
      %v155 = vmul.f32 %v140, %v150
      %v156 = vmul.f32 %v141, %v151
      %v157 = vadd.f32 %v155, %v156
      %v158 = vadd.f32 %v140, %v141
      %v159 = vadd.f32 %v150, %v151
      %160 = vst [vmem:[#allocation10] sm:$0xff] %v154
      %s161 = scalar_lea.vmem [#allocation10], 8
      %162 = vst [vmem:[%s161] sm:$0xff] %v157
      %s163 = scalar_lea.vmem [#allocation10], 16
      %164 = vst [vmem:[%s163] sm:$0xff] %v158
      %s165 = scalar_lea.vmem [#allocation10], 24
      %166 = vst [vmem:[%s165] sm:$0xff] %v159
    $region33: #{tpu_custom_call.1} parent=1 // pred_fallthru
      _
    // Predicated region
    $region34: #{tpu_custom_call.1} parent=1 // pred_check
      _
    $region35: #{tpu_custom_call.1} parent=1 // pred_check_branch
      %168 = sbr.rel (0) target = $region37
    $region36: #{tpu_custom_call.1} parent=1 // pred_region
      %s170 = ssub.s32 512, 512
      %171 = vsyncadd [#allocation6], %s170
      %s172 = sshll.u32 [#allocation10], 4
      %s173 = int_to_ptr.vmem [resolvable:$true] %s172
      %178 = dma.vmem_to_hbm [thread:$0]  %s173, 512, %s4, [#allocation6], 128, 128, 8
    $region37: #{tpu_custom_call.1} parent=1 // pred_fallthru
      _
    // Predicated region
    $region38: #{tpu_custom_call.1} parent=1 // pred_check
      _
    $region39: #{tpu_custom_call.1} parent=1 // pred_check_branch
      %180 = sbr.rel (0) target = $region41
    $region40: #{tpu_custom_call.1} parent=1 // pred_region
      %181 = dma.done [#allocation6], 512
    $region41: #{tpu_custom_call.1} parent=1 // pred_fallthru
      _
    %182 = vsyncpa [#allocation5], 1
    %183 = vsyncpa [#allocation8], 1
    %184 = vsyncpa [#allocation6], 1

</llo_original>
